<compile_context>
chip_gen: v6e
topology: v6e:2x2x1
jax: 0.10.0
libtpu: 0.0.40
codegen_flags: <defaults>
</compile_context>

<pallas_src>
import functools

import jax
import jax.numpy as jnp
from jax.experimental import pallas as pl
from jax.experimental.pallas import tpu as pltpu


def _round_up(x, m):
    return (x + m - 1) // m * m


def _pick_tile_n(N, tile_n):
    """Pick TILE_N so that (ideally) TILE_N divides N and is a multiple of 8."""
    if N <= tile_n:
        # Full-dim block: exempt from the 8-divisibility rule, grid = (1,).
        return N, N
    for cand in range(min(tile_n, N), 7, -1):
        if N % cand == 0 and cand % 8 == 0:
            return cand, N
    # Fallback: pad N (rare -- num_patches is almost always 8-divisible).
    t = min(tile_n, _round_up(N, 8))
    return t, _round_up(N, t)


def _patch_embed_kernel(x_ref, w_ref, p_ref, o_ref, *, embed_dim, epad):
    # x_ref: (TILE_N, P)    flattened patches (true K, no padding)
    # w_ref: (P, Epad)      projection weight (E zero-padded to Epad)
    # p_ref: (3, Epad)      [bias; gamma; beta], f32, zero-padded lanes
    # o_ref: (TILE_N, Epad)
    y = jnp.dot(x_ref[...], w_ref[...], preferred_element_type=jnp.float32)
    y = y + p_ref[0:1, :]  # bias

    # INVARIANT: padded weight columns (>= embed_dim) and padded bias lanes
    # are exactly zero, so padded lanes of y are exactly 0.  The unmasked
    # mean below relies on this.
    inv_e = 1.0 / float(embed_dim)
    mean = jnp.sum(y, axis=-1, keepdims=True) * inv_e
    centered = y - mean
    if embed_dim == epad:
        var = jnp.sum(centered * centered, axis=-1, keepdims=True) * inv_e
    else:
        # (1, Epad) lane mask; broadcasts inside the where (no full-tile iota).
        lane = jax.lax.broadcasted_iota(jnp.int32, (1, epad), 1)
        valid = lane < embed_dim
        var = jnp.sum(jnp.where(valid, centered * centered, 0.0),
                      axis=-1, keepdims=True) * inv_e
    y_norm = centered * jax.lax.rsqrt(var + 1e-5)
    o_ref[...] = (y_norm * p_ref[1:2, :] + p_ref[2:3, :]).astype(o_ref.dtype)


def patch_embed(x, conv_w, conv_b, ln_gamma, ln_beta, patch_size,
                *, tile_n=2048, compute_dtype=None, out_dtype=None):
    """x: (B, C, H, W) NCHW  ->  (B, num_patches, embed_dim).

    conv_w: (embed_dim, C, ph, pw); conv_b/ln_gamma/ln_beta: (embed_dim,)
    compute_dtype: optional dtype (e.g. jnp.bfloat16 on v5e/v6e/v7x) for the
      matmul operands only; accumulation + LayerNorm math stay f32.
    out_dtype: optional output dtype (e.g. bf16 for a bf16 downstream block).
    """
    B, C, H, W = x.shape
    ph, pw = patch_size
    E = conv_w.shape[0]
    Hp, Wp = H // ph, W // pw
    num_patches = Hp * Wp
    P = C * ph * pw
    N = B * num_patches
    out_dtype = x.dtype if out_dtype is None else out_dtype

    # --- wrapper glue: extract non-overlapping patches, channel-major
    # flatten; transpose + reshape + cast fuse into a single XLA copy.
    xp = x.reshape(B, C, Hp, ph, Wp, pw)
    xp = jnp.transpose(xp, (0, 2, 4, 1, 3, 5)).reshape(N, P)
    w2d = conv_w.reshape(E, P).T
    if compute_dtype is not None:
        xp = xp.astype(compute_dtype)
        w2d = w2d.astype(compute_dtype)

    # --- only the embed dim is padded (lane-dense, unmasked output stores).
    # K (=P) and N are NOT padded.
    Epad = _round_up(E, 128)
    TILE_N, Npad = _pick_tile_n(N, tile_n)
    if Npad != N:
        xp = jnp.pad(xp, ((0, Npad - N), (0, 0)))
    if Epad != E:
        # Zero-padded columns/lanes -> padded lanes of y are exactly 0.
        w2d = jnp.pad(w2d, ((0, 0), (0, Epad - E)))
    params = jnp.stack([
        conv_b.astype(jnp.float32),
        ln_gamma.astype(jnp.float32),
        ln_beta.astype(jnp.float32),
    ])
    if Epad != E:
        params = jnp.pad(params, ((0, 0), (0, Epad - E)))
    # TODO(synk): when E is not a 128-multiple, benchmark true-E-width output
    # (masked vst, no strip pass) vs this padded-write + strip.

    grid = (Npad // TILE_N,)
    op_bytes = jnp.dtype(xp.dtype).itemsize
    ob = jnp.dtype(out_dtype).itemsize
    kernel = functools.partial(_patch_embed_kernel, embed_dim=E, epad=Epad)

    out = pl.pallas_call(
        kernel,
        out_shape=jax.ShapeDtypeStruct((Npad, Epad), out_dtype),
        grid=grid,
        in_specs=[
            pl.BlockSpec((TILE_N, P), lambda i: (i, 0)),   # streamed over N
            pl.BlockSpec((P, Epad), lambda i: (0, 0)),     # VMEM-resident weight
            pl.BlockSpec((3, Epad), lambda i: (0, 0)),     # bias/gamma/beta
        ],
        out_specs=pl.BlockSpec((TILE_N, Epad), lambda i: (i, 0)),
        compiler_params=pltpu.CompilerParams(
            dimension_semantics=("parallel",),
        ),
        cost_estimate=pl.CostEstimate(
            flops=2 * Npad * P * Epad,
            transcendentals=Npad,
            bytes_accessed=op_bytes * (Npad * P + P * Epad)
            + 4 * 3 * Epad
            + ob * Npad * Epad,
        ),
    )(xp, w2d, params)

    # Free view when Npad == N and Epad == E; otherwise strips padding.
    return out[:N, :E].reshape(B, num_patches, E)


def _patch_embed_ref(x, conv_w, conv_b, ln_gamma, ln_beta, patch_size):
    """Pure-JAX reference for correctness checking (f32)."""
    B, C, H, W = x.shape
    ph, pw = patch_size
    E = conv_w.shape[0]
    Hp, Wp = H // ph, W // pw
    xp = x.reshape(B, C, Hp, ph, Wp, pw)
    xp = jnp.transpose(xp, (0, 2, 4, 1, 3, 5)).reshape(B * Hp * Wp, C * ph * pw)
    y = xp @ conv_w.reshape(E, -1).T + conv_b[None, :]
    mean = jnp.mean(y, axis=-1, keepdims=True)
    var = jnp.mean((y - mean) ** 2, axis=-1, keepdims=True)
    y = (y - mean) * jax.lax.rsqrt(var + 1e-5) * ln_gamma[None, :] + ln_beta[None, :]
    return y.reshape(B, Hp * Wp, E)


if __name__ == "__main__":
    # Small config consistent with the module.
    B, C, H, W = 2, 4, 16, 16
    patch_size = (4, 4)
    embed_dim = 32

    key = jax.random.PRNGKey(0)
    kx, kw, kb = jax.random.split(key, 3)

    x = jax.random.normal(kx, (B, C, H, W), dtype=jnp.float32)
    conv_w = 0.02 * jax.random.normal(
        kw, (embed_dim, C, patch_size[0], patch_size[1]), dtype=jnp.float32
    )
    conv_b = 0.01 * jax.random.normal(kb, (embed_dim,), dtype=jnp.float32)
    ln_gamma = jnp.ones((embed_dim,), dtype=jnp.float32)
    ln_beta = jnp.zeros((embed_dim,), dtype=jnp.float32)

    num_patches = (H // patch_size[0]) * (W // patch_size[1])
    ref = _patch_embed_ref(x, conv_w, conv_b, ln_gamma, ln_beta, patch_size)

    # f32 operands: must match the PyTorch-style reference tightly.
    out = patch_embed(x, conv_w, conv_b, ln_gamma, ln_beta, patch_size)
    out = jax.block_until_ready(out)
    assert out.shape == (B, num_patches, embed_dim)
    assert jnp.allclose(out, ref, atol=1e-4, rtol=1e-4), "f32 mismatch vs reference"

    # bf16 operands (recommended default on v5e/v6e/v7x): looser tolerance,
    # LayerNorm math stays f32 in-kernel.
    out_bf16 = patch_embed(x, conv_w, conv_b, ln_gamma, ln_beta, patch_size,
                           compute_dtype=jnp.bfloat16)
    out_bf16 = jax.block_until_ready(out_bf16)
    assert jnp.allclose(out_bf16, ref, atol=5e-2, rtol=5e-2), "bf16 mismatch vs reference"

    print("KERNEL_OK")
</pallas_src>

<mosaic_0001>
module attributes {stable_mosaic.version = 11 : i64} {
  func.func @_patch_embed_kernel(%arg0: i32, %arg1: memref<32x64xf32, #tpu.memory_space<vmem>>, %arg2: memref<64x128xf32, #tpu.memory_space<vmem>>, %arg3: memref<3x128xf32, #tpu.memory_space<vmem>>, %arg4: memref<32x128xf32, #tpu.memory_space<vmem>>) attributes {dimension_semantics = [#tpu.dimension_semantics<parallel>], iteration_bounds = array<i64: 1>, scalar_prefetch = 0 : i64, scratch_operands = 0 : i64, tpu.core_type = #tpu.core_type<tc>, window_params = [{transform_indices = @transform_0, window_bounds = array<i64: 32, 64>}, {pipeline_mode = #tpu.pipeline_mode<synchronous>, transform_indices = @transform_1, window_bounds = array<i64: 64, 128>}, {pipeline_mode = #tpu.pipeline_mode<synchronous>, transform_indices = @transform_2, window_bounds = array<i64: 3, 128>}, {transform_indices = @transform_3, window_bounds = array<i64: 32, 128>}]} {
    %c0 = arith.constant 0 : index
    %c0_0 = arith.constant 0 : index
    %0 = vector.load %arg1[%c0, %c0_0] : memref<32x64xf32, #tpu.memory_space<vmem>>, vector<32x64xf32>
    %c0_1 = arith.constant 0 : index
    %c0_2 = arith.constant 0 : index
    %1 = vector.load %arg2[%c0_1, %c0_2] : memref<64x128xf32, #tpu.memory_space<vmem>>, vector<64x128xf32>
    %cst = arith.constant dense<0.000000e+00> : vector<32x128xf32>
    %2 = tpu.matmul %0, %1, %cst {dimension_numbers = #tpu.dot_dimension_numbers<[1], [0], [0], [1], [0, 0, 1, 1], [], []>} : vector<32x64xf32>, vector<64x128xf32>, vector<32x128xf32> -> vector<32x128xf32>
    %c0_3 = arith.constant 0 : index
    %c0_4 = arith.constant 0 : index
    %3 = vector.load %arg3[%c0_3, %c0_4] : memref<3x128xf32, #tpu.memory_space<vmem>>, vector<1x128xf32>
    %4 = vector.broadcast %3 : vector<1x128xf32> to vector<32x128xf32>
    %5 = arith.addf %2, %4 : vector<32x128xf32>
    %cst_5 = arith.constant dense<0.000000e+00> : vector<32xf32>
    %6 = vector.multi_reduction <add>, %5, %cst_5 [1] : vector<32x128xf32> to vector<32xf32>
    %7 = vector.shape_cast %6 : vector<32xf32> to vector<32x1xf32>
    %cst_6 = arith.constant 3.125000e-02 : f32
    %8 = vector.broadcast %cst_6 : f32 to vector<32x1xf32>
    %9 = arith.mulf %7, %8 : vector<32x1xf32>
    %10 = vector.broadcast %9 : vector<32x1xf32> to vector<32x128xf32>
    %11 = arith.subf %5, %10 : vector<32x128xf32>
    %12 = tpu.iota {dimensions = array<i32: 1>} : vector<1x128xi32>
    %c32_i32 = arith.constant 32 : i32
    %13 = vector.broadcast %c32_i32 : i32 to vector<1x128xi32>
    %14 = arith.cmpi slt, %12, %13 : vector<1x128xi32>
    %15 = arith.mulf %11, %11 : vector<32x128xf32>
    %cst_7 = arith.constant 0.000000e+00 : f32
    %16 = vector.shape_cast %14 : vector<1x128xi1> to vector<1x128xi1>
    %17 = vector.broadcast %16 : vector<1x128xi1> to vector<32x128xi1>
    %18 = vector.broadcast %cst_7 : f32 to vector<32x128xf32>
    %19 = arith.select %17, %15, %18 : vector<32x128xi1>, vector<32x128xf32>
    %cst_8 = arith.constant dense<0.000000e+00> : vector<32xf32>
    %20 = vector.multi_reduction <add>, %19, %cst_8 [1] : vector<32x128xf32> to vector<32xf32>
    %21 = vector.shape_cast %20 : vector<32xf32> to vector<32x1xf32>
    %cst_9 = arith.constant 3.125000e-02 : f32
    %22 = vector.broadcast %cst_9 : f32 to vector<32x1xf32>
    %23 = arith.mulf %21, %22 : vector<32x1xf32>
    %cst_10 = arith.constant 9.99999974E-6 : f32
    %24 = vector.broadcast %cst_10 : f32 to vector<32x1xf32>
    %25 = arith.addf %23, %24 : vector<32x1xf32>
    %26 = math.rsqrt %25 : vector<32x1xf32>
    %27 = vector.broadcast %26 : vector<32x1xf32> to vector<32x128xf32>
    %28 = arith.mulf %11, %27 : vector<32x128xf32>
    %c1 = arith.constant 1 : index
    %c0_11 = arith.constant 0 : index
    %29 = vector.load %arg3[%c1, %c0_11] : memref<3x128xf32, #tpu.memory_space<vmem>>, vector<1x128xf32>
    %30 = vector.broadcast %29 : vector<1x128xf32> to vector<32x128xf32>
    %31 = arith.mulf %28, %30 : vector<32x128xf32>
    %c2 = arith.constant 2 : index
    %c0_12 = arith.constant 0 : index
    %32 = vector.load %arg3[%c2, %c0_12] : memref<3x128xf32, #tpu.memory_space<vmem>>, vector<1x128xf32>
    %33 = vector.broadcast %32 : vector<1x128xf32> to vector<32x128xf32>
    %34 = arith.addf %31, %33 : vector<32x128xf32>
    %c0_13 = arith.constant 0 : index
    %c0_14 = arith.constant 0 : index
    %35 = vector.load %arg4[%c0_13, %c0_14] : memref<32x128xf32, #tpu.memory_space<vmem>>, vector<32x128xf32>
    tpu.vector_store %arg4[%c0_13, %c0_14], %34 {strides = array<i32>} : memref<32x128xf32, #tpu.memory_space<vmem>>, vector<32x128xf32>,
    return
  }
  func.func @transform_0(%arg0: i32) -> (i32, i32) {
    %c0_i32 = arith.constant 0 : i32
    %c0_i32_0 = arith.constant 0 : i32
    return %arg0, %c0_i32 : i32, i32
  }
  func.func @transform_1(%arg0: i32) -> (i32, i32) {
    %c0_i32 = arith.constant 0 : i32
    %c0_i32_0 = arith.constant 0 : i32
    %c0_i32_1 = arith.constant 0 : i32
    return %c0_i32, %c0_i32_0 : i32, i32
  }
  func.func @transform_2(%arg0: i32) -> (i32, i32) {
    %c0_i32 = arith.constant 0 : i32
    %c0_i32_0 = arith.constant 0 : i32
    %c0_i32_1 = arith.constant 0 : i32
    return %c0_i32, %c0_i32_0 : i32, i32
  }
  func.func @transform_3(%arg0: i32) -> (i32, i32) {
    %c0_i32 = arith.constant 0 : i32
    %c0_i32_0 = arith.constant 0 : i32
    return %arg0, %c0_i32 : i32, i32
  }
}

</mosaic_0001>

<llo_original>
// kernel: tpu_custom_call.1
$region0: #{tpu_custom_call.1}
  #allocation0 [shape = 'u32[]', space=smem, size = 0x4, offset = 0x4, fixed_abs, tag = 'smem constant byte address 0x4 - core index']
  #allocation1 [shape = 'u32[144,128]{1,0:T(1,128)}', space=vmem, size = 0x12000, scoped, tag = 'internal scratch']
  %s0 = inlined_call_operand.hbm [shape: f32[32,64], index: 0, kind: input, shape index: {}]
  %s1 = inlined_call_operand.hbm [shape: f32[64,128], index: 1, kind: input, shape index: {}]
  %s2 = inlined_call_operand.hbm [shape: f32[3,128], index: 2, kind: input, shape index: {}]
  %s3 = inlined_call_operand.hbm [shape: f32[32,128], index: 3, kind: output, shape index: {}]
  %s4 = sld [smem:[#allocation0]]
  $region34: #{tpu_custom_call.1} parent=0
    _
  %s6 = ssub.s32 1, %s4
  %s7 = scalar_select 0, %s6, %s4
  $region1: #{tpu_custom_call.1} parent=0
    #allocation2 [shape = 'u8[16384]{0}', space=vmem, size = 0x4000, scoped, tag = 'input window, operand 0, single buffered']
    #allocation3 [shape = 's32[1]{0}', space=sflag, size = 0x4, scoped, tag = 'scoped memory for tpu_custom_call.1']
    #allocation4 [shape = 's32[1]{0}', space=sflag, size = 0x4, scoped, tag = 'scoped memory for tpu_custom_call.1']
    #allocation5 [shape = 'u8[32768]{0}', space=vmem, size = 0x8000, scoped, tag = 'input window, operand 1, single buffered']
    #allocation6 [shape = 's32[1]{0}', space=sflag, size = 0x4, scoped, tag = 'scoped memory for tpu_custom_call.1']
    #allocation7 [shape = 'u8[2048]{0}', space=vmem, size = 0x800, scoped, tag = 'input window, operand 2, single buffered']
    #allocation8 [shape = 'u8[16384]{0}', space=vmem, size = 0x4000, scoped, tag = 'output window, operand 0, single buffered']
    %8 = vsyncpa [#allocation3], 0
    %9 = vsyncpa [#allocation6], 0
    %10 = vsyncpa [#allocation4], 0
    // Predicated region
    $region2: #{tpu_custom_call.1} parent=1 // pred_check
      _
    $region3: #{tpu_custom_call.1} parent=1 // pred_check_branch
      %12 = sbr.rel (0) target = $region5
    $region4: #{tpu_custom_call.1} parent=1 // pred_region
      %s14 = ssub.s32 512, 512
      %15 = vsyncadd [#allocation3], %s14
      %s16 = sshll.u32 [#allocation2], 4
      %s17 = int_to_ptr.vmem [resolvable:$true] %s16
      %22 = dma.hbm_to_vmem [thread:$0]  %s0, 512, %s17, [#allocation3], 128, 128, 8
    $region5: #{tpu_custom_call.1} parent=1 // pred_fallthru
      _
    // Predicated region
    $region6: #{tpu_custom_call.1} parent=1 // pred_check
      _
    $region7: #{tpu_custom_call.1} parent=1 // pred_check_branch
      %24 = sbr.rel (0) target = $region9
    $region8: #{tpu_custom_call.1} parent=1 // pred_region
      %s26 = ssub.s32 1024, 1024
      %27 = vsyncadd [#allocation6], %s26
      %s28 = sshll.u32 [#allocation5], 4
      %s29 = int_to_ptr.vmem [resolvable:$true] %s28
      %34 = dma.hbm_to_vmem [thread:$0]  %s1, 1024, %s29, [#allocation6], 128, 128, 8
    $region9: #{tpu_custom_call.1} parent=1 // pred_fallthru
      _
    // Predicated region
    $region10: #{tpu_custom_call.1} parent=1 // pred_check
      _
    $region11: #{tpu_custom_call.1} parent=1 // pred_check_branch
      %36 = sbr.rel (0) target = $region13
    $region12: #{tpu_custom_call.1} parent=1 // pred_region
      %s38 = ssub.s32 64, 64
      %39 = vsyncadd [#allocation6], %s38
      %s41 = sshll.u32 [#allocation7], 4
      %s42 = int_to_ptr.vmem [resolvable:$true] %s41
      %44 = dma.hbm_to_vmem [thread:$0]  %s2, 64, %s42, [#allocation6]
    $region13: #{tpu_custom_call.1} parent=1 // pred_fallthru
      _
    // Predicated region
    $region14: #{tpu_custom_call.1} parent=1 // pred_check
      _
    $region15: #{tpu_custom_call.1} parent=1 // pred_check_branch
      %46 = sbr.rel (0) target = $region17
    $region16: #{tpu_custom_call.1} parent=1 // pred_region
      %47 = dma.done [#allocation3], 512
    $region17: #{tpu_custom_call.1} parent=1 // pred_fallthru
      _
    // Predicated region
    $region18: #{tpu_custom_call.1} parent=1 // pred_check
      _
    $region19: #{tpu_custom_call.1} parent=1 // pred_check_branch
      %49 = sbr.rel (0) target = $region21
    $region20: #{tpu_custom_call.1} parent=1 // pred_region
      %50 = dma.done [#allocation6], 1024
    $region21: #{tpu_custom_call.1} parent=1 // pred_fallthru
      _
    // Predicated region
    $region22: #{tpu_custom_call.1} parent=1 // pred_check
      _
    $region23: #{tpu_custom_call.1} parent=1 // pred_check_branch
      %52 = sbr.rel (0) target = $region25
    $region24: #{tpu_custom_call.1} parent=1 // pred_region
      %53 = dma.done [#allocation6], 64
    $region25: #{tpu_custom_call.1} parent=1 // pred_fallthru
      _
    %v54 = vld [vmem:[#allocation2] sm:$0xff]
    %v55 = vld [vmem:[#allocation2 + $0x8] sm:$0xff]
    %v56 = vld [vmem:[#allocation2 + $0x10] sm:$0xff]
    %v57 = vld [vmem:[#allocation2 + $0x18] sm:$0xff]
    %v58 = vld [vmem:[#allocation5] sm:$0xff]
    %v59 = vld [vmem:[#allocation5 + $0x8] sm:$0xff]
    %v60 = vld [vmem:[#allocation5 + $0x10] sm:$0xff]
    %v61 = vld [vmem:[#allocation5 + $0x18] sm:$0xff]
    %v62 = vld [vmem:[#allocation5 + $0x20] sm:$0xff]
    %v63 = vld [vmem:[#allocation5 + $0x28] sm:$0xff]
    %v64 = vld [vmem:[#allocation5 + $0x30] sm:$0xff]
    %v65 = vld [vmem:[#allocation5 + $0x38] sm:$0xff]
    %v66 = vld [vmem:[#allocation7] sm:$0x1]
    %v67 = vlaneseq
    %v68 = vshrl.u32 %v67, 7
    %v69 = vsub.s32 0, %v68
    %v70 = vrot.slane %v66, %v69
    %vm71 = vcmask 523264
    %v73 = vsel %vm71, %v54, 0
    %v76 = vsel %vm71, %v55, 0
    %v79 = vsel %vm71, %v56, 0
    %v82 = vsel %vm71, %v57, 0
    %84 = vmatprep.subr.mxu0 0.0
    %85 = vmatpush1.msra.mxu0 0.0
    %86 = vmatprep.subr.mxu0 0.0
    %87 = vmatpush1.msra.mxu0 0.0
    %88 = vmatprep.subr.mxu0 0.0
    %89 = vmatpush1.msra.mxu0 0.0
    %90 = vmatprep.subr.mxu0 0.0
    %91 = vmatpush1.msra.mxu0 0.0
    %92 = vmatprep.subr.mxu0 0.0
    %93 = vmatpush1.msra.mxu0 0.0
    %94 = vmatprep.subr.mxu0 0.0
    %95 = vmatpush1.msra.mxu0 0.0
    %96 = vmatprep.subr.mxu0 0.0
    %97 = vmatpush1.msra.mxu0 0.0
    %98 = vmatprep.subr.mxu0 0.0
    %99 = vmatpush1.msra.mxu0 0.0
    %100 = vmatprep.subr.mxu0 0.0
    %101 = vmatpush1.msra.mxu0 %v65
    %102 = vmatprep.subr.mxu0 0.0
    %103 = vmatpush1.msra.mxu0 %v64
    %104 = vmatprep.subr.mxu0 0.0
    %105 = vmatpush1.msra.mxu0 %v63
    %106 = vmatprep.subr.mxu0 0.0
    %107 = vmatpush1.msra.mxu0 %v62
    %108 = vmatprep.subr.mxu0 0.0
    %109 = vmatpush1.msra.mxu0 %v61
    %110 = vmatprep.subr.mxu0 0.0
    %111 = vmatpush1.msra.mxu0 %v60
    %112 = vmatprep.subr.mxu0 0.0
    %113 = vmatpush1.msra.mxu0 %v59
    %114 = vmatprep.subr.mxu0 0.0
    %115 = vmatpush1.msra.mxu0 %v58
    %116 = vmatprep.subr.mxu0 0.0
    %117 = vmatpush2.msra.mxu0 0.0
    %118 = vmatprep.subr.mxu0 0.0
    %119 = vmatpush2.msra.mxu0 0.0
    %120 = vmatprep.subr.mxu0 0.0
    %121 = vmatpush2.msra.mxu0 0.0
    %122 = vmatprep.subr.mxu0 0.0
    %123 = vmatpush2.msra.mxu0 0.0
    %124 = vmatprep.subr.mxu0 0.0
    %125 = vmatpush2.msra.mxu0 0.0
    %126 = vmatprep.subr.mxu0 0.0
    %127 = vmatpush2.msra.mxu0 0.0
    %128 = vmatprep.subr.mxu0 0.0
    %129 = vmatpush2.msra.mxu0 0.0
    %130 = vmatprep.subr.mxu0 0.0
    %131 = vmatpush2.msra.mxu0 0.0
    %132 = vmatprep.subr.mxu0 0.0
    %133 = vmatpush2.msra.mxu0 0.0
    %134 = vmatprep.subr.mxu0 0.0
    %135 = vmatpush2.msra.mxu0 0.0
    %136 = vmatprep.subr.mxu0 0.0
    %137 = vmatpush2.msra.mxu0 0.0
    %138 = vmatprep.subr.mxu0 0.0
    %139 = vmatpush2.msra.mxu0 0.0
    %140 = vmatprep.subr.mxu0 0.0
    %141 = vmatpush2.msra.mxu0 0.0
    %142 = vmatprep.subr.mxu0 0.0
    %143 = vmatpush2.msra.mxu0 0.0
    %144 = vmatprep.subr.mxu0 0.0
    %145 = vmatpush2.msra.mxu0 0.0
    %146 = vmatprep.subr.mxu0 0.0
    %147 = vmatpush2.msra.mxu0 0.0
    %148 = vmatprep.mubr.f32.mxu0 0.0
    %149 = vmatmul.mubr.f32.gmra.mxu0 %v73
    %v150 = vpop.f32.mrf.mxu0
    %v151 = vadd.f32 %v70, %v150
    %v152 = vpop.f32.mrf.mxu0
    %153 = vmatprep.mubr.f32.mxu0 0.0
    %154 = vmatmul.mubr.f32.gmra.mxu0 %v76
    %v155 = vpop.f32.mrf.mxu0
    %v156 = vadd.f32 %v70, %v155
    %v157 = vpop.f32.mrf.mxu0
    %158 = vmatprep.mubr.f32.mxu0 0.0
    %159 = vmatmul.mubr.f32.gmra.mxu0 %v79
    %v160 = vpop.f32.mrf.mxu0
    %v161 = vadd.f32 %v70, %v160
    %v162 = vpop.f32.mrf.mxu0
    %163 = vmatprep.mubr.f32.mxu0 0.0
    %164 = vmatmul.mubr.f32.gmra.mxu0 %v82
    %v165 = vpop.f32.mrf.mxu0
    %v166 = vadd.f32 %v70, %v165
    %v167 = vpop.f32.mrf.mxu0
    %168 = vdwg.mxu0
    %169 = vadd.xlane.f32.xlu0 %v151
    %v170 = vpop.xlane.xlu0 %169
    %171 = vadd.xlane.f32.xlu0 %v156
    %v172 = vpop.xlane.xlu0 %171
    %173 = vadd.xlane.f32.xlu0 %v161
    %v174 = vpop.xlane.xlu0 %173
    %175 = vadd.xlane.f32.xlu0 %v166
    %v176 = vpop.xlane.xlu0 %175
    %v177 = vmul.f32 %v170, 0.03125
    %v178 = vmul.f32 %v172, 0.03125
    %v179 = vmul.f32 %v174, 0.03125
    %v180 = vmul.f32 %v176, 0.03125
    %v181 = vsub.f32 %v151, %v177
    %v182 = vsub.f32 %v156, %v178
    %v183 = vsub.f32 %v161, %v179
    %v184 = vsub.f32 %v166, %v180
    %v185 = vlaneseq
    %v186 = vand.u32 %v185, 127
    %vm187 = vcmp.lt.s32.totalorder %v186, 32
    %v188 = vmul.f32 %v181, %v181
    %v189 = vmul.f32 %v182, %v182
    %v190 = vmul.f32 %v183, %v183
    %v191 = vmul.f32 %v184, %v184
    %v192 = vsel %vm187, 1, 0
    %vm193 = vcmp.eq.s32.totalorder %v192, 1
    %v194 = vsel %vm193, %v188, 0.0
    %v195 = vsel %vm193, %v189, 0.0
    %v196 = vsel %vm193, %v190, 0.0
    %v197 = vsel %vm193, %v191, 0.0
    %198 = vadd.xlane.f32.xlu0 %v194
    %v199 = vpop.xlane.xlu0 %198
    %200 = vadd.xlane.f32.xlu0 %v195
    %v201 = vpop.xlane.xlu0 %200
    %202 = vadd.xlane.f32.xlu0 %v196
    %v203 = vpop.xlane.xlu0 %202
    %204 = vadd.xlane.f32.xlu0 %v197
    %v205 = vpop.xlane.xlu0 %204
    %v206 = vmul.f32 %v199, 0.03125
    %v207 = vmul.f32 %v201, 0.03125
    %v208 = vmul.f32 %v203, 0.03125
    %v209 = vmul.f32 %v205, 0.03125
    %v210 = vadd.f32 %v206, 1e-05
    %v211 = vadd.f32 %v207, 1e-05
    %v212 = vadd.f32 %v208, 1e-05
    %v213 = vadd.f32 %v209, 1e-05
    %v214 = vrsqrt.pop %v210
    %v215 = vrsqrt.pop %v211
    %v216 = vrsqrt.pop %v212
    %v217 = vrsqrt.pop %v213
    %v218 = vmul.f32 %v181, %v214
    %v219 = vmul.f32 %v182, %v215
    %v220 = vmul.f32 %v183, %v216
    %v221 = vmul.f32 %v184, %v217
    %v222 = vld [vmem:[#allocation7 + $0x1] sm:$0x1]
    %v223 = vlaneseq
    %v224 = vshrl.u32 %v223, 7
    %v225 = vsub.s32 0, %v224
    %v226 = vrot.slane %v222, %v225
    %v227 = vmul.f32 %v218, %v226
    %v228 = vmul.f32 %v219, %v226
    %v229 = vmul.f32 %v220, %v226
    %v230 = vmul.f32 %v221, %v226
    %v231 = vld [vmem:[#allocation7 + $0x2] sm:$0x1]
    %v232 = vlaneseq
    %v233 = vshrl.u32 %v232, 7
    %v234 = vsub.s32 0, %v233
    %v235 = vrot.slane %v231, %v234
    %v236 = vadd.f32 %v227, %v235
    %v237 = vadd.f32 %v228, %v235
    %v238 = vadd.f32 %v229, %v235
    %v239 = vadd.f32 %v230, %v235
    %240 = vst [vmem:[#allocation8] sm:$0xff] %v236
    %241 = vst [vmem:[#allocation8 + $0x8] sm:$0xff] %v237
    %242 = vst [vmem:[#allocation8 + $0x10] sm:$0xff] %v238
    %243 = vst [vmem:[#allocation8 + $0x18] sm:$0xff] %v239
    // Predicated region
    $region26: #{tpu_custom_call.1} parent=1 // pred_check
      _
    $region27: #{tpu_custom_call.1} parent=1 // pred_check_branch
      %245 = sbr.rel (0) target = $region29
    $region28: #{tpu_custom_call.1} parent=1 // pred_region
      %s247 = ssub.s32 512, 512
      %248 = vsyncadd [#allocation4], %s247
      %s249 = sshll.u32 [#allocation8], 4
      %s250 = int_to_ptr.vmem [resolvable:$true] %s249
      %255 = dma.vmem_to_hbm [thread:$0]  %s250, 512, %s3, [#allocation4], 128, 128, 8
    $region29: #{tpu_custom_call.1} parent=1 // pred_fallthru
      _
    // Predicated region
    $region30: #{tpu_custom_call.1} parent=1 // pred_check
      _
    $region31: #{tpu_custom_call.1} parent=1 // pred_check_branch
      %257 = sbr.rel (0) target = $region33
    $region32: #{tpu_custom_call.1} parent=1 // pred_region
      %258 = dma.done [#allocation4], 512
    $region33: #{tpu_custom_call.1} parent=1 // pred_fallthru
      _
    %259 = vsyncpa [#allocation3], 1
    %260 = vsyncpa [#allocation6], 1
    %261 = vsyncpa [#allocation4], 1

</llo_original>
